<compile_context>
chip_gen: v5e
topology: v5e:2x2
jax: 0.10.0
libtpu: 0.0.40
codegen_flags: <defaults>
</compile_context>

<pallas_src>
import jax
import jax.numpy as jnp
from jax.experimental import pallas as pl
from jax.experimental.pallas import tpu as pltpu


def _spatial_att_kernel(x_ref, w1_ref, b1_ref, w2_ref, b2_ref, o_ref):
    # x_ref : (b_n, C, t_rows, L)  VMEM tile (pixels dense on sublanes+lanes)
    # w1_ref: (C * Cr,)            SMEM, conv1 1x1 weight, index [c * Cr + cr]
    # b1_ref: (Cr,)                SMEM, conv1 bias
    # w2_ref: (Cr,)                SMEM, conv2 1x1 weight
    # b2_ref: (1,)                 SMEM, conv2 bias
    # o_ref : (b_n, 1, t_rows, L)  VMEM, dense output tile
    C = x_ref.shape[1]
    Cr = b1_ref.shape[0]

    # C*Cr is tiny, so unroll the channel mixes as scalar-broadcast FMAs on
    # the VPU (kernel is HBM-bound; the VPU has huge slack).  Channels are
    # loaded as (b_n, 1, t_rows, L) slices so every intermediate keeps the
    # dense (t_rows, L) minor layout.
    y = None
    for cr in range(Cr):
        acc = None
        for c in range(C):
            xc = x_ref[:, c:c + 1].astype(jnp.float32)      # (b_n,1,t_rows,L)
            term = xc * w1_ref[c * Cr + cr]
            acc = term if acc is None else acc + term
        h = jnp.maximum(acc + b1_ref[cr], 0.0)               # ReLU
        contrib = h * w2_ref[cr]
        y = contrib if y is None else y + contrib
    y = y + b2_ref[0]

    # Exact sigmoid (exp goes to the EUP slot; the divide cost is irrelevant
    # on a memory-bound kernel and keeps the 1e-5 tolerance).
    o_ref[...] = (1.0 / (1.0 + jnp.exp(-y))).astype(o_ref.dtype)


def _pick_lane_width(hw, cap=512):
    """Largest power-of-two multiple of 128 that divides hw, capped at `cap`."""
    if hw % 128 != 0:
        return None
    lane = 128
    while lane * 2 <= cap and hw % (lane * 2) == 0:
        lane *= 2
    return lane


def spatial_att(x, w1, b1, w2, b2, *, block_bytes=8 << 20):
    """SpatialAtt forward.

    x : [N, C, H, W] float32 (or bf16)
    w1: [C, Cr]   conv1 1x1 weight (torch weight [Cr, C, 1, 1] -> (Cin, Cout))
    b1: [Cr]      conv1 bias
    w2: [Cr, 1]   conv2 1x1 weight
    b2: [1]       conv2 bias
    returns [N, 1, H, W]
    """
    N, C, H, W = x.shape
    Cr = b1.shape[0]
    HW = H * W
    itemsize = jnp.dtype(x.dtype).itemsize

    # ---- Pixel-axis blocking: (rows, L) with L a multiple of 128 -----------
    L = _pick_lane_width(HW)
    if L is None:
        # HW not a multiple of 128: fall back to one full-width lane row.
        # Full-dim blocks are accepted regardless of the (8,128) rule.
        rows, L, t_rows = 1, HW, 1
    else:
        rows = HW // L
        # Row-tile: a multiple of 8 sublanes sized toward block_bytes for one
        # batch element, capped at the full row count.
        row_bytes = C * L * itemsize
        t_rows = max(8, (block_bytes // row_bytes) // 8 * 8)
        if t_rows >= rows:
            t_rows = rows  # whole spatial plane in one tile (full-dim block)

    # ---- Batch folding for small feature maps ------------------------------
    b_n = 1
    if t_rows == rows:
        blk_bytes_now = C * t_rows * L * itemsize
        b_n = min(N, max(1, block_bytes // max(blk_bytes_now, 1)))
        while N % b_n != 0:  # keep batch blocks non-ragged
            b_n -= 1

    # ---- Make sure there are >= 2 grid steps when possible (v7x: 2 TCs) ----
    if (N // b_n) == 1 and pl.cdiv(rows, t_rows) == 1:
        if b_n > 1:
            for d in range(b_n // 2, 0, -1):
                if N % d == 0:
                    b_n = d
                    break
        elif rows >= 16:
            t_rows = ((rows + 1) // 2 + 7) // 8 * 8

    grid = (N // b_n, pl.cdiv(rows, t_rows))

    # Free view of NCHW: pixels become a dense (rows, L) minor block.
    x_blk = x.reshape(N, C, rows, L)

    out_blk = pl.pallas_call(
        _spatial_att_kernel,
        out_shape=jax.ShapeDtypeStruct((N, 1, rows, L), x.dtype),
        grid_spec=pltpu.PrefetchScalarGridSpec(
            num_scalar_prefetch=0,
            grid=grid,
            in_specs=[
                pl.BlockSpec((b_n, C, t_rows, L),
                             lambda n, p: (n, 0, p, 0)),                # x tile
                pl.BlockSpec(memory_space=pltpu.MemorySpace.SMEM),      # w1
                pl.BlockSpec(memory_space=pltpu.MemorySpace.SMEM),      # b1
                pl.BlockSpec(memory_space=pltpu.MemorySpace.SMEM),      # w2
                pl.BlockSpec(memory_space=pltpu.MemorySpace.SMEM),      # b2
            ],
            out_specs=pl.BlockSpec((b_n, 1, t_rows, L),
                                   lambda n, p: (n, 0, p, 0)),
        ),
        compiler_params=pltpu.CompilerParams(
            dimension_semantics=("parallel", "parallel"),
            vmem_limit_bytes=48 << 20),
    )(
        x_blk,
        w1.reshape(C * Cr).astype(jnp.float32),
        b1.reshape(Cr).astype(jnp.float32),
        w2.reshape(Cr).astype(jnp.float32),
        b2.reshape(1).astype(jnp.float32),
    )

    # [N, 1, rows, L] is already NCHW-ordered; this reshape is a free view.
    return out_blk.reshape(N, 1, H, W)


def _reference(x, w1, b1, w2, b2):
    # Pure-JAX reference of the same math (1x1 convs as einsums over channels).
    h = jnp.einsum('nchw,cd->ndhw', x, w1) + b1.reshape(1, -1, 1, 1)
    h = jnp.maximum(h, 0.0)
    y = jnp.einsum('ndhw,do->nohw', h, w2) + b2.reshape(1, -1, 1, 1)
    return jax.nn.sigmoid(y)


if __name__ == "__main__":
    key = jax.random.PRNGKey(0)
    N, C, H, W = 2, 4, 16, 16
    reduction = 4
    Cr = max(C // reduction, 1)  # = 1

    k_x, k_w1, k_b1, k_w2, k_b2 = jax.random.split(key, 5)
    x = jax.random.normal(k_x, (N, C, H, W), dtype=jnp.float32)

    # Conv2d 1x1 weights stored as channel-mix matrices:
    # torch Conv2d weight [Cout, Cin, 1, 1] -> here (Cin, Cout).
    w1 = jax.random.normal(k_w1, (C, Cr), dtype=jnp.float32) * 0.5
    b1 = jax.random.normal(k_b1, (Cr,), dtype=jnp.float32) * 0.1
    w2 = jax.random.normal(k_w2, (Cr, 1), dtype=jnp.float32) * 0.5
    b2 = jax.random.normal(k_b2, (1,), dtype=jnp.float32) * 0.1

    out = spatial_att(x, w1, b1, w2, b2)
    out = jax.block_until_ready(out)

    ref = _reference(x, w1, b1, w2, b2)
    assert out.shape == (N, 1, H, W), out.shape
    assert jnp.allclose(out, ref, atol=1e-5, rtol=1e-5), (
        float(jnp.max(jnp.abs(out - ref))))

    print("KERNEL_OK")
</pallas_src>

<mosaic_0001>
module attributes {stable_mosaic.version = 11 : i64} {
  func.func @_spatial_att_kernel(%arg0: i32, %arg1: i32, %arg2: memref<1x4x1x256xf32, #tpu.memory_space<vmem>>, %arg3: memref<4xf32, #tpu.memory_space<smem>>, %arg4: memref<1xf32, #tpu.memory_space<smem>>, %arg5: memref<1xf32, #tpu.memory_space<smem>>, %arg6: memref<1xf32, #tpu.memory_space<smem>>, %arg7: memref<1x1x1x256xf32, #tpu.memory_space<vmem>>) attributes {dimension_semantics = [#tpu.dimension_semantics<parallel>, #tpu.dimension_semantics<parallel>], iteration_bounds = array<i64: 2, 1>, scalar_prefetch = 0 : i64, scratch_operands = 0 : i64, tpu.core_type = #tpu.core_type<tc>, window_params = [{transform_indices = @transform_0, window_bounds = array<i64: 1, 4, 1, 256>}, {transform_indices = @transform_1, window_bounds = array<i64: 4>}, {transform_indices = @transform_2, window_bounds = array<i64: 1>}, {transform_indices = @transform_3, window_bounds = array<i64: 1>}, {transform_indices = @transform_4, window_bounds = array<i64: 1>}, {transform_indices = @transform_5, window_bounds = array<i64: 1, 1, 1, 256>}]} {
    %c0 = arith.constant 0 : index
    %c0_0 = arith.constant 0 : index
    %c0_1 = arith.constant 0 : index
    %c0_2 = arith.constant 0 : index
    %0 = vector.load %arg2[%c0, %c0_0, %c0_1, %c0_2] : memref<1x4x1x256xf32, #tpu.memory_space<vmem>>, vector<1x1x1x256xf32>
    %c0_3 = arith.constant 0 : index
    %1 = memref.load %arg3[%c0_3] : memref<4xf32, #tpu.memory_space<smem>>
    %2 = vector.broadcast %1 : f32 to vector<1x1x1x256xf32>
    %3 = arith.mulf %0, %2 : vector<1x1x1x256xf32>
    %c0_4 = arith.constant 0 : index
    %c1 = arith.constant 1 : index
    %c0_5 = arith.constant 0 : index
    %c0_6 = arith.constant 0 : index
    %4 = vector.load %arg2[%c0_4, %c1, %c0_5, %c0_6] : memref<1x4x1x256xf32, #tpu.memory_space<vmem>>, vector<1x1x1x256xf32>
    %c1_7 = arith.constant 1 : index
    %5 = memref.load %arg3[%c1_7] : memref<4xf32, #tpu.memory_space<smem>>
    %6 = vector.broadcast %5 : f32 to vector<1x1x1x256xf32>
    %7 = arith.mulf %4, %6 : vector<1x1x1x256xf32>
    %8 = arith.addf %3, %7 : vector<1x1x1x256xf32>
    %c0_8 = arith.constant 0 : index
    %c2 = arith.constant 2 : index
    %c0_9 = arith.constant 0 : index
    %c0_10 = arith.constant 0 : index
    %9 = vector.load %arg2[%c0_8, %c2, %c0_9, %c0_10] : memref<1x4x1x256xf32, #tpu.memory_space<vmem>>, vector<1x1x1x256xf32>
    %c2_11 = arith.constant 2 : index
    %10 = memref.load %arg3[%c2_11] : memref<4xf32, #tpu.memory_space<smem>>
    %11 = vector.broadcast %10 : f32 to vector<1x1x1x256xf32>
    %12 = arith.mulf %9, %11 : vector<1x1x1x256xf32>
    %13 = arith.addf %8, %12 : vector<1x1x1x256xf32>
    %c0_12 = arith.constant 0 : index
    %c3 = arith.constant 3 : index
    %c0_13 = arith.constant 0 : index
    %c0_14 = arith.constant 0 : index
    %14 = vector.load %arg2[%c0_12, %c3, %c0_13, %c0_14] : memref<1x4x1x256xf32, #tpu.memory_space<vmem>>, vector<1x1x1x256xf32>
    %c3_15 = arith.constant 3 : index
    %15 = memref.load %arg3[%c3_15] : memref<4xf32, #tpu.memory_space<smem>>
    %16 = vector.broadcast %15 : f32 to vector<1x1x1x256xf32>
    %17 = arith.mulf %14, %16 : vector<1x1x1x256xf32>
    %18 = arith.addf %13, %17 : vector<1x1x1x256xf32>
    %c0_16 = arith.constant 0 : index
    %19 = memref.load %arg4[%c0_16] : memref<1xf32, #tpu.memory_space<smem>>
    %20 = vector.broadcast %19 : f32 to vector<1x1x1x256xf32>
    %21 = arith.addf %18, %20 : vector<1x1x1x256xf32>
    %cst = arith.constant 0.000000e+00 : f32
    %22 = vector.broadcast %cst : f32 to vector<1x1x1x256xf32>
    %23 = arith.maximumf %21, %22 : vector<1x1x1x256xf32>
    %c0_17 = arith.constant 0 : index
    %24 = memref.load %arg5[%c0_17] : memref<1xf32, #tpu.memory_space<smem>>
    %25 = vector.broadcast %24 : f32 to vector<1x1x1x256xf32>
    %26 = arith.mulf %23, %25 : vector<1x1x1x256xf32>
    %c0_18 = arith.constant 0 : index
    %27 = memref.load %arg6[%c0_18] : memref<1xf32, #tpu.memory_space<smem>>
    %28 = vector.broadcast %27 : f32 to vector<1x1x1x256xf32>
    %29 = arith.addf %26, %28 : vector<1x1x1x256xf32>
    %cst_19 = arith.constant 0.000000e+00 : f32
    %30 = vector.broadcast %cst_19 : f32 to vector<1x1x1x256xf32>
    %31 = arith.subf %30, %29 : vector<1x1x1x256xf32>
    %32 = math.exp %31 : vector<1x1x1x256xf32>
    %cst_20 = arith.constant 1.000000e+00 : f32
    %33 = vector.broadcast %cst_20 : f32 to vector<1x1x1x256xf32>
    %34 = arith.addf %33, %32 : vector<1x1x1x256xf32>
    %cst_21 = arith.constant 1.000000e+00 : f32
    %35 = vector.broadcast %cst_21 : f32 to vector<1x1x1x256xf32>
    %36 = arith.divf %35, %34 : vector<1x1x1x256xf32>
    %c0_22 = arith.constant 0 : index
    %c0_23 = arith.constant 0 : index
    %c0_24 = arith.constant 0 : index
    %c0_25 = arith.constant 0 : index
    %37 = vector.load %arg7[%c0_22, %c0_23, %c0_24, %c0_25] : memref<1x1x1x256xf32, #tpu.memory_space<vmem>>, vector<1x1x1x256xf32>
    tpu.vector_store %arg7[%c0_22, %c0_23, %c0_24, %c0_25], %36 {strides = array<i32>} : memref<1x1x1x256xf32, #tpu.memory_space<vmem>>, vector<1x1x1x256xf32>,
    return
  }
  func.func @transform_0(%arg0: i32, %arg1: i32) -> (i32, i32, i32, i32) {
    %c0_i32 = arith.constant 0 : i32
    %c0_i32_0 = arith.constant 0 : i32
    %c0_i32_1 = arith.constant 0 : i32
    return %arg0, %c0_i32, %arg1, %c0_i32_0 : i32, i32, i32, i32
  }
  func.func @transform_1(%arg0: i32, %arg1: i32) -> i32 {
    %c0_i32 = arith.constant 0 : i32
    %c0_i32_0 = arith.constant 0 : i32
    return %c0_i32 : i32
  }
  func.func @transform_2(%arg0: i32, %arg1: i32) -> i32 {
    %c0_i32 = arith.constant 0 : i32
    %c0_i32_0 = arith.constant 0 : i32
    return %c0_i32 : i32
  }
  func.func @transform_3(%arg0: i32, %arg1: i32) -> i32 {
    %c0_i32 = arith.constant 0 : i32
    %c0_i32_0 = arith.constant 0 : i32
    return %c0_i32 : i32
  }
  func.func @transform_4(%arg0: i32, %arg1: i32) -> i32 {
    %c0_i32 = arith.constant 0 : i32
    %c0_i32_0 = arith.constant 0 : i32
    return %c0_i32 : i32
  }
  func.func @transform_5(%arg0: i32, %arg1: i32) -> (i32, i32, i32, i32) {
    %c0_i32 = arith.constant 0 : i32
    %c0_i32_0 = arith.constant 0 : i32
    %c0_i32_1 = arith.constant 0 : i32
    return %arg0, %c0_i32, %arg1, %c0_i32_0 : i32, i32, i32, i32
  }
}

</mosaic_0001>

<llo_original>
// kernel: tpu_custom_call.1
$region0: #{tpu_custom_call.1}
  #allocation0 [shape = 'u32[]', space=smem, size = 0x4, offset = 0x4, fixed_abs, tag = 'smem constant byte address 0x4 - core index']
  #allocation1 [shape = 'u32[72,128]{1,0:T(1,128)}', space=vmem, size = 0x9000, scoped, tag = 'internal scratch']
  #allocation2 [shape = 'f32[1]{0:T(128)S(6)}', space=smem, size = 0x200, scoped, tag = 'scoped memory for tpu_custom_call.1']
  #allocation3 [shape = 'f32[1]{0:T(128)S(6)}', space=smem, size = 0x200, scoped, tag = 'scoped memory for tpu_custom_call.1']
  #allocation4 [shape = 'f32[1]{0:T(128)S(6)}', space=smem, size = 0x200, scoped, tag = 'scoped memory for tpu_custom_call.1']
  %s0 = inlined_call_operand.hbm [shape: f32[2,4,1,256], index: 0, kind: input, shape index: {}]
  %s1 = inlined_call_operand.vmem [shape: f32[4], index: 1, kind: input, shape index: {}]
  %s2 = inlined_call_operand.<no memory space> [shape: f32[1], index: 2, kind: input, shape index: {}]
  %s3 = inlined_call_operand.<no memory space> [shape: f32[1], index: 3, kind: input, shape index: {}]
  %s4 = inlined_call_operand.<no memory space> [shape: f32[1], index: 4, kind: input, shape index: {}]
  %s5 = inlined_call_operand.hbm [shape: f32[2,1,1,256], index: 5, kind: output, shape index: {}]
  %s6 = sld [smem:[#allocation0]]
  $region61: #{tpu_custom_call.1} parent=0
    _
  %s8 = ssub.s32 1, %s6
  %s9 = scalar_select 0, %s8, %s6
  %10 = sst [smem:[#allocation2]] %s2
  %11 = sst [smem:[#allocation3]] %s3
  %12 = sst [smem:[#allocation4]] %s4
  $region1: #{tpu_custom_call.1} parent=0
    #allocation5 [shape = 'u8[8192]{0}', space=vmem, size = 0x2000, scoped, tag = 'input window, operand 0']
    #allocation6 [shape = 's32[2]{0}', space=sflag, size = 0x8, scoped, tag = 'scoped memory for tpu_custom_call.1']
    #allocation7 [shape = 's32[2]{0}', space=sflag, size = 0x8, scoped, tag = 'scoped memory for tpu_custom_call.1']
    #allocation8 [shape = 's32[2]{0}', space=sflag, size = 0x8, scoped, tag = 'scoped memory for tpu_custom_call.1']
    #allocation9 [shape = 'u8[512]{0}', space=smem, size = 0x200, scoped, tag = 'input window, operand 1, single buffered']
    #allocation10 [shape = 'u8[2048]{0}', space=vmem, size = 0x800, scoped, tag = 'output window, operand 0']
    %13 = vsyncpa [#allocation6], 0
    %s14 = scalar_lea.sflag [#allocation6], 1
    %15 = vsyncpa %s14, 0
    %16 = vsyncpa [#allocation8], 0
    %17 = vsyncpa [#allocation7], 0
    %s18 = scalar_lea.sflag [#allocation7], 1
    %19 = vsyncpa %s18, 0
    loop: start=0, step=1, limit=4
    $region2: #{tpu_custom_call.1} parent=1 // loop_pre_header
      _
    $region3: #{tpu_custom_call.1} parent=1 // loop_header
      %s21 = sphi 0, %s25
      %p22 = scmp.ge.s32.totalorder %s21, 4
      %s28 = sphi 0, %s40
      %s29 = sphi 0, %s36
      %s30 = sphi 0, %s28
      %s31 = sphi 0, %s29
      %s32 = sphi 0, %s30
      %s33 = sphi 0, %s31
      %s45 = sphi 0, %s47
      %s48 = sphi 0, %s45
      %s49 = sphi 0, %s48
      %s65 = sphi 0, %s49
      %s69 = sphi 0, %s69
      %s71 = sphi 0, %s69
      %s72 = sphi 0, %s71
      %s86 = sphi 0, %s72
      %s90 = sphi 0, %s90
      %s92 = sphi 0, %s90
      %s93 = sphi 0, %s92
      %s107 = sphi 0, %s93
      %s111 = sphi 0, %s111
      %s113 = sphi 0, %s111
      %s114 = sphi 0, %s113
      %s128 = sphi 0, %s114
      %s132 = sphi 0, %s132
      %s134 = sphi 0, %s132
      %s135 = sphi 0, %s134
      %s149 = sphi 0, %s135
      %s157 = sphi 0, %s159
      %s160 = sphi 0, %s157
      %s161 = sphi 0, %s160
      %s177 = sphi 0, %s161
    $region4: #{tpu_custom_call.1} parent=1 // loop_header_branch
      %24 = sbr.rel (%p22) target = $region8
    $region5: #{tpu_custom_call.1} parent=1 // loop_body
      %s26 = ssub.s32 %s21, 1
      %s27 = ssub.s32 %s21, 2
      %s34 = sadd.s32 1, %s29
      %p35 = scmp.ge.s32.totalorder %s34, 1
      %s36 = scalar_select %p35, 0, %s34
      %s37 = sadd.s32 1, %s28
      %s38 = scalar_select %p35, %s37, %s28
      %p39 = scmp.ge.s32.totalorder %s38, 2
      %s40 = scalar_select %p39, 0, %s38
      %s41 = ssub.s32 %s28, %s40
      %s42 = ssub.s32 %s29, %s36
      %s43 = sor.u32 %s41, %s42
      %p44 = scmp.eq.s32.totalorder %s43, 0
      %s46 = sadd.s32 %s45, 1
      %s47 = scalar_select %p44, %s45, %s46
      %p50 = pneg %p44
      %p51 = scmp.eq.s32.totalorder %s21, 1
      %p52 = por %p50, %p51
      %p53 = scmp.ne.s32.totalorder %s45, %s48
      %p54 = scmp.eq.s32.totalorder %s21, 0
      %p55 = por %p53, %p54
      %p56 = scmp.ne.s32.totalorder %s45, %s48
      %p57 = scmp.eq.s32.totalorder %s26, 1
      %p58 = por %p56, %p57
      %p59 = scmp.ne.s32.totalorder %s48, %s49
      %p60 = scmp.eq.s32.totalorder %s26, 0
      %p61 = por %p59, %p60
      %p62 = scmp.ne.s32.totalorder %s48, %s49
      %p63 = scmp.eq.s32.totalorder %s27, 1
      %p64 = por %p62, %p63
      %p66 = scmp.ne.s32.totalorder %s49, %s65
      %p67 = scmp.eq.s32.totalorder %s27, 0
      %p68 = por %p66, %p67
      %s70 = sadd.s32 %s69, 1
      %p73 = scmp.eq.s32.totalorder %s21, 1
      %p74 = scmp.ne.s32.totalorder %s69, %s71
      %p75 = scmp.eq.s32.totalorder %s21, 0
      %p76 = por %p74, %p75
      %p77 = scmp.ne.s32.totalorder %s69, %s71
      %p78 = scmp.eq.s32.totalorder %s26, 1
      %p79 = por %p77, %p78
      %p80 = scmp.ne.s32.totalorder %s71, %s72
      %p81 = scmp.eq.s32.totalorder %s26, 0
      %p82 = por %p80, %p81
      %p83 = scmp.ne.s32.totalorder %s71, %s72
      %p84 = scmp.eq.s32.totalorder %s27, 1
      %p85 = por %p83, %p84
      %p87 = scmp.ne.s32.totalorder %s72, %s86
      %p88 = scmp.eq.s32.totalorder %s27, 0
      %p89 = por %p87, %p88
      %s91 = sadd.s32 %s90, 1
      %p94 = scmp.eq.s32.totalorder %s21, 1
      %p95 = scmp.ne.s32.totalorder %s90, %s92
      %p96 = scmp.eq.s32.totalorder %s21, 0
      %p97 = por %p95, %p96
      %p98 = scmp.ne.s32.totalorder %s90, %s92
      %p99 = scmp.eq.s32.totalorder %s26, 1
      %p100 = por %p98, %p99
      %p101 = scmp.ne.s32.totalorder %s92, %s93
      %p102 = scmp.eq.s32.totalorder %s26, 0
      %p103 = por %p101, %p102
      %p104 = scmp.ne.s32.totalorder %s92, %s93
      %p105 = scmp.eq.s32.totalorder %s27, 1
      %p106 = por %p104, %p105
      %p108 = scmp.ne.s32.totalorder %s93, %s107
      %p109 = scmp.eq.s32.totalorder %s27, 0
      %p110 = por %p108, %p109
      %s112 = sadd.s32 %s111, 1
      %p115 = scmp.eq.s32.totalorder %s21, 1
      %p116 = scmp.ne.s32.totalorder %s111, %s113
      %p117 = scmp.eq.s32.totalorder %s21, 0
      %p118 = por %p116, %p117
      %p119 = scmp.ne.s32.totalorder %s111, %s113
      %p120 = scmp.eq.s32.totalorder %s26, 1
      %p121 = por %p119, %p120
      %p122 = scmp.ne.s32.totalorder %s113, %s114
      %p123 = scmp.eq.s32.totalorder %s26, 0
      %p124 = por %p122, %p123
      %p125 = scmp.ne.s32.totalorder %s113, %s114
      %p126 = scmp.eq.s32.totalorder %s27, 1
      %p127 = por %p125, %p126
      %p129 = scmp.ne.s32.totalorder %s114, %s128
      %p130 = scmp.eq.s32.totalorder %s27, 0
      %p131 = por %p129, %p130
      %s133 = sadd.s32 %s132, 1
      %p136 = scmp.eq.s32.totalorder %s21, 1
      %p137 = scmp.ne.s32.totalorder %s132, %s134
      %p138 = scmp.eq.s32.totalorder %s21, 0
      %p139 = por %p137, %p138
      %p140 = scmp.ne.s32.totalorder %s132, %s134
      %p141 = scmp.eq.s32.totalorder %s26, 1
      %p142 = por %p140, %p141
      %p143 = scmp.ne.s32.totalorder %s134, %s135
      %p144 = scmp.eq.s32.totalorder %s26, 0
      %p145 = por %p143, %p144
      %p146 = scmp.ne.s32.totalorder %s134, %s135
      %p147 = scmp.eq.s32.totalorder %s27, 1
      %p148 = por %p146, %p147
      %p150 = scmp.ne.s32.totalorder %s135, %s149
      %p151 = scmp.eq.s32.totalorder %s27, 0
      %p152 = por %p150, %p151
      %s153 = ssub.s32 %s28, %s40
      %s154 = ssub.s32 %s29, %s36
      %s155 = sor.u32 %s153, %s154
      %p156 = scmp.eq.s32.totalorder %s155, 0
      %s158 = sadd.s32 %s157, 1
      %s159 = scalar_select %p156, %s157, %s158
      %p162 = pneg %p156
      %p163 = scmp.eq.s32.totalorder %s21, 1
      %p164 = por %p162, %p163
      %p165 = scmp.ne.s32.totalorder %s157, %s160
      %p166 = scmp.eq.s32.totalorder %s21, 0
      %p167 = por %p165, %p166
      %p168 = scmp.ne.s32.totalorder %s157, %s160
      %p169 = scmp.eq.s32.totalorder %s26, 1
      %p170 = por %p168, %p169
      %p171 = scmp.ne.s32.totalorder %s160, %s161
      %p172 = scmp.eq.s32.totalorder %s26, 0
      %p173 = por %p171, %p172
      %p174 = scmp.ne.s32.totalorder %s160, %s161
      %p175 = scmp.eq.s32.totalorder %s27, 1
      %p176 = por %p174, %p175
      %p178 = scmp.ne.s32.totalorder %s161, %s177
      %p179 = scmp.eq.s32.totalorder %s27, 0
      %p180 = por %p178, %p179
      %p181 = scmp.le.s32.totalorder 1, %s21
      %p182 = scmp.lt.s32.totalorder %s21, 3
      %p183 = pnand %p181, %p182
      %p184 = pneg %p183
      // Predicated region
      $region9: #{tpu_custom_call.1} parent=5 // pred_check
        _
      $region10: #{tpu_custom_call.1} parent=5 // pred_check_branch
        %186 = sbr.rel (%p183) target = $region12
      $region11: #{tpu_custom_call.1} parent=5 // pred_region
        %s187 = ssub.s32 %s21, 1
        // Predicated region
        $region13: #{tpu_custom_call.1} parent=11 // pred_check
          %p188 = pneg %p82
        $region14: #{tpu_custom_call.1} parent=11 // pred_check_branch
          %190 = sbr.rel (%p188) target = $region16
        $region15: #{tpu_custom_call.1} parent=11 // pred_region
          %192 = vsyncadd [#allocation8], 0
          %s194 = sshll.u32 %s1, 4
          %s195 = int_to_ptr.vmem [resolvable:$true] %s194
          %197 = dma.vmem_to_smem %s195, 16, [#allocation9], [#allocation8]
        $region16: #{tpu_custom_call.1} parent=11 // pred_fallthru
          _
        // Predicated region
        $region17: #{tpu_custom_call.1} parent=11 // pred_check
          %p198 = pneg %p103
        $region18: #{tpu_custom_call.1} parent=11 // pred_check_branch
          %200 = sbr.rel (%p198) target = $region20
        $region19: #{tpu_custom_call.1} parent=11 // pred_region
          _
        $region20: #{tpu_custom_call.1} parent=11 // pred_fallthru
          _
        // Predicated region
        $region21: #{tpu_custom_call.1} parent=11 // pred_check
          %p201 = pneg %p124
        $region22: #{tpu_custom_call.1} parent=11 // pred_check_branch
          %203 = sbr.rel (%p201) target = $region24
        $region23: #{tpu_custom_call.1} parent=11 // pred_region
          _
        $region24: #{tpu_custom_call.1} parent=11 // pred_fallthru
          _
        // Predicated region
        $region25: #{tpu_custom_call.1} parent=11 // pred_check
          %p204 = pneg %p145
        $region26: #{tpu_custom_call.1} parent=11 // pred_check_branch
          %206 = sbr.rel (%p204) target = $region28
        $region27: #{tpu_custom_call.1} parent=11 // pred_region
          _
        $region28: #{tpu_custom_call.1} parent=11 // pred_fallthru
          _
      $region12: #{tpu_custom_call.1} parent=5 // pred_fallthru
        _
      %p207 = scmp.lt.s32.totalorder %s21, 2
      // Predicated region
      $region29: #{tpu_custom_call.1} parent=5 // pred_check
        %p208 = pneg %p207
      $region30: #{tpu_custom_call.1} parent=5 // pred_check_branch
        %210 = sbr.rel (%p208) target = $region32
      $region31: #{tpu_custom_call.1} parent=5 // pred_region
        // Predicated region
        $region33: #{tpu_custom_call.1} parent=31 // pred_check
          %p211 = pneg %p55
        $region34: #{tpu_custom_call.1} parent=31 // pred_check_branch
          %213 = sbr.rel (%p211) target = $region36
        $region35: #{tpu_custom_call.1} parent=31 // pred_region
          %s214 = sand.u32 %s45, 1
          %s215 = scalar_lea.sflag [#allocation6], %s214
          %s216 = sand.u32 %s45, 1
          %s217 = smul.addr %s216, 8
          %s218 = scalar_lea.vmem [#allocation5], %s217
          %220 = vsyncadd %s215, 0
          %s221 = smul.addr %s29, 2
          %s222 = smul.addr %s28, 8
          %s223 = sadd.s32 %s221, %s222
          %s224 = scalar_lea.hbm %s0, %s223
          %s225 = sshll.u32 %s224, 4
          %s226 = int_to_ptr.hbm [resolvable:$true] %s225
          %s227 = sshll.u32 %s218, 4
          %s228 = int_to_ptr.vmem [resolvable:$true] %s227
          %233 = dma.hbm_to_vmem [thread:$0]  %s226, 128, %s228, %s215, 32, 32, 2
        $region36: #{tpu_custom_call.1} parent=31 // pred_fallthru
          _
      $region32: #{tpu_custom_call.1} parent=5 // pred_fallthru
        _
      %p234 = scmp.le.s32.totalorder 1, %s21
      %p235 = scmp.lt.s32.totalorder %s21, 3
      %p236 = pnand %p234, %p235
      %p237 = pneg %p236
      // Predicated region
      $region37: #{tpu_custom_call.1} parent=5 // pred_check
        _
      $region38: #{tpu_custom_call.1} parent=5 // pred_check_branch
        %239 = sbr.rel (%p236) target = $region40
      $region39: #{tpu_custom_call.1} parent=5 // pred_region
        %s240 = ssub.s32 %s21, 1
        %s241 = sand.u32 %s48, 1
        %s242 = scalar_lea.sflag [#allocation6], %s241
        %s243 = sand.u32 %s48, 1
        %s244 = smul.addr %s243, 8
        %s245 = scalar_lea.vmem [#allocation5], %s244
        // Predicated region
        $region41: #{tpu_custom_call.1} parent=39 // pred_check
          %p246 = pneg %p61
        $region42: #{tpu_custom_call.1} parent=39 // pred_check_branch
          %248 = sbr.rel (%p246) target = $region44
        $region43: #{tpu_custom_call.1} parent=39 // pred_region
          %250 = dma.done %s242, 128
        $region44: #{tpu_custom_call.1} parent=39 // pred_fallthru
          _
        // Predicated region
        $region45: #{tpu_custom_call.1} parent=39 // pred_check
          %p251 = pneg %p82
        $region46: #{tpu_custom_call.1} parent=39 // pred_check_branch
          %253 = sbr.rel (%p251) target = $region48
        $region47: #{tpu_custom_call.1} parent=39 // pred_region
          %255 = dma.done [#allocation8], 16
        $region48: #{tpu_custom_call.1} parent=39 // pred_fallthru
          _
        %256 = sfence
        %s257 = sand.u32 %s48, 1
        %s258 = scalar_lea.sflag [#allocation6], %s257
        %s259 = sand.u32 %s48, 1
        %s260 = smul.addr %s259, 8
        %s261 = scalar_lea.vmem [#allocation5], %s260
        %p262 = pneg %p61
        %p263 = pneg %p58
        %p264 = pneg %p82
        %p265 = pneg %p79
        %p266 = pneg %p103
        %p267 = pneg %p100
        %p268 = pneg %p124
        %p269 = pneg %p121
        %p270 = pneg %p145
        %p271 = pneg %p142
        %p272 = pneg %p173
        %p273 = pneg %p170
        %s274 = sand.u32 %s160, 1
        %s275 = scalar_lea.sflag [#allocation7], %s274
        %s276 = sand.u32 %s160, 1
        %s277 = smul.addr %s276, 2
        %s278 = scalar_lea.vmem [#allocation10], %s277
        %v279 = vld [vmem:[%s245] sm:$0x3]
        %s280 = sld [smem:[#allocation9]]
        %v281 = vstv %s280
        %v282 = vmul.f32 %v279, %v281
        %s283 = scalar_lea.vmem %s245, 2 [#allocation5]
        %v284 = vld [vmem:[%s283] sm:$0x3]
        %s285 = sld [smem:[#allocation9 + $0x1]]
        %v286 = vstv %s285
        %v287 = vmul.f32 %v284, %v286
        %v288 = vadd.f32 %v282, %v287
        %s289 = scalar_lea.vmem %s245, 4 [#allocation5]
        %v290 = vld [vmem:[%s289] sm:$0x3]
        %s291 = sld [smem:[#allocation9 + $0x2]]
        %v292 = vstv %s291
        %v293 = vmul.f32 %v290, %v292
        %v294 = vadd.f32 %v288, %v293
        %s295 = scalar_lea.vmem %s245, 6 [#allocation5]
        %v296 = vld [vmem:[%s295] sm:$0x3]
        %s297 = sld [smem:[#allocation9 + $0x3]]
        %v298 = vstv %s297
        %v299 = vmul.f32 %v296, %v298
        %v300 = vadd.f32 %v294, %v299
        %s301 = sld [smem:[#allocation2]]
        %v302 = vstv %s301
        %v303 = vadd.f32 %v300, %v302
        %v304 = vmax.f32 %v303, 0.0
        %s305 = sld [smem:[#allocation3]]
        %v306 = vstv %s305
        %v307 = vmul.f32 %v304, %v306
        %s308 = sld [smem:[#allocation4]]
        %v309 = vstv %s308
        %v310 = vadd.f32 %v307, %v309
        %v311 = vsub.f32 0.0, %v310
        %v312 = vmul.f32 %v311, 1.442695
        %v313 = vpow.pop %v312
        %v314 = vadd.f32 %v313, 1.0
        %v315 = vrcp.pop %v314
        %v316 = vmul.f32 %v314, %v315
        %v317 = vsub.f32 1.0, %v316
        %v318 = vmul.f32 %v315, %v317
        %v319 = vadd.f32 %v315, %v318
        %vm320 = vweird.f32 %v314
        %vm321 = vweird.f32 %v315
        %vm322 = vmor %vm320, %vm321
        %v323 = vsel %vm322, %v315, %v319
        %v324 = vand.u32 2147483647, %v314
        %vm325 = vcmp.eq.f32.partialorder %v324, 8.507059e+37
        %v326 = vand.u32 %v314, 2147483648
        %v327 = vor.u32 1.1754944e-38, %v326
        %v328 = vsel %vm325, %v327, %v323
        %v329 = vmul.f32 1.0, %v328
        %v330 = vlaneseq
        %vm331 = vcmp.ge.s32.totalorder %v330, 0
        %vm332 = vcmp.lt.s32.totalorder %v330, 256
        %vm333 = vmand %vm331, %vm332
        %334 = vst.msk [vmem:[%s278] sm:$0x3] %vm333, %v329
        %s335 = sand.u32 %s160, 1
        %s336 = scalar_lea.sflag [#allocation7], %s335
        %s337 = sand.u32 %s160, 1
        %s338 = smul.addr %s337, 2
        %s339 = scalar_lea.vmem [#allocation10], %s338
        // Predicated region
        $region49: #{tpu_custom_call.1} parent=39 // pred_check
          %p340 = pneg %p170
        $region50: #{tpu_custom_call.1} parent=39 // pred_check_branch
          %342 = sbr.rel (%p340) target = $region52
        $region51: #{tpu_custom_call.1} parent=39 // pred_region
          %344 = vsyncadd %s336, 0
          %s345 = smul.addr %s31, 2
          %s346 = smul.addr %s30, 2
          %s347 = sadd.s32 %s345, %s346
          %s348 = scalar_lea.hbm %s5, %s347
          %s350 = sshll.u32 %s339, 4
          %s351 = int_to_ptr.vmem [resolvable:$true] %s350
          %s352 = sshll.u32 %s348, 4
          %s353 = int_to_ptr.hbm [resolvable:$true] %s352
          %355 = dma.vmem_to_hbm [thread:$0]  %s351, 32, %s353, %s336
        $region52: #{tpu_custom_call.1} parent=39 // pred_fallthru
          _
      $region40: #{tpu_custom_call.1} parent=5 // pred_fallthru
        _
      %p356 = scmp.le.s32.totalorder 2, %s21
      // Predicated region
      $region53: #{tpu_custom_call.1} parent=5 // pred_check
        %p357 = pneg %p356
      $region54: #{tpu_custom_call.1} parent=5 // pred_check_branch
        %359 = sbr.rel (%p357) target = $region56
      $region55: #{tpu_custom_call.1} parent=5 // pred_region
        %s360 = ssub.s32 %s21, 2
        // Predicated region
        $region57: #{tpu_custom_call.1} parent=55 // pred_check
          %p361 = pneg %p176
        $region58: #{tpu_custom_call.1} parent=55 // pred_check_branch
          %363 = sbr.rel (%p361) target = $region60
        $region59: #{tpu_custom_call.1} parent=55 // pred_region
          %s364 = sand.u32 %s161, 1
          %s365 = scalar_lea.sflag [#allocation7], %s364
          %s366 = sand.u32 %s161, 1
          %s367 = smul.addr %s366, 2
          %s368 = scalar_lea.vmem [#allocation10], %s367
          %370 = dma.done %s365, 32
        $region60: #{tpu_custom_call.1} parent=55 // pred_fallthru
          _
      $region56: #{tpu_custom_call.1} parent=5 // pred_fallthru
        _
    $region6: #{tpu_custom_call.1} parent=1 // loop_footer
      %s25 = sadd.s32 1, %s21
    $region7: #{tpu_custom_call.1} parent=1 // loop_footer_branch
      %20 = sbr.rel target = $region3
    $region8: #{tpu_custom_call.1} parent=1 // loop_exit
      _
    %371 = vsyncpa [#allocation6], 1
    %s372 = scalar_lea.sflag [#allocation6], 1
    %373 = vsyncpa %s372, 1
    %374 = vsyncpa [#allocation7], 1
    %s375 = scalar_lea.sflag [#allocation7], 1
    %376 = vsyncpa %s375, 1
    %377 = vsyncpa [#allocation8], 1
    %s378 = scalar_lea.sflag [#allocation8], 1
    %379 = vsyncpa %s378, 1

</llo_original>
